<compile_context>
chip_gen: v6e
topology: v6e:2x2x1
jax: 0.10.0
libtpu: 0.0.40
codegen_flags: <defaults>
</compile_context>

<pallas_src>
import functools

import jax
import jax.numpy as jnp
import numpy as np
from jax import lax
from jax.experimental import pallas as pl
from jax.experimental.pallas import tpu as pltpu


# ----------------------------------------------------------------------------
# MADE mask construction (pure NumPy glue, mirrors _generate_sequential)
# ----------------------------------------------------------------------------
def _generate_sequential(dims):
    in_dim = dims[0]
    out_dim = dims[-1]
    degrees = [np.arange(in_dim) + 1]
    for dim in dims[1:-1]:
        degrees.append(np.arange(dim) % (in_dim - 1) + 1)
    degrees.append(np.arange(out_dim) % in_dim)
    return degrees


def build_made_masks(dims):
    m = _generate_sequential(dims)
    masks = []
    for i in range(len(dims) - 1):
        # mask shape [out_dim, in_dim], same as the PyTorch buffer
        mask = (m[i + 1][:, None] >= m[i][None, :]).astype(np.float32)
        masks.append(jnp.asarray(mask))
    return masks


def init_made_params(key, dims):
    """Deterministic init mimicking nn.Linear (uniform(-1/sqrt(fan_in), ...))."""
    weights, biases = [], []
    for in_dim, out_dim in zip(dims, dims[1:]):
        key, kw, kb = jax.random.split(key, 3)
        bound = 1.0 / np.sqrt(in_dim)
        w = jax.random.uniform(kw, (out_dim, in_dim), jnp.float32, -bound, bound)
        b = jax.random.uniform(kb, (out_dim,), jnp.float32, -bound, bound)
        weights.append(w)
        biases.append(b)
    return weights, biases


def _round_up(x, m):
    return ((x + m - 1) // m) * m


def _vmem_capacity_bytes():
    """Physical VMEM per core (generation-aware); conservative fallback."""
    try:
        return int(pltpu.get_tpu_info().vmem_capacity_bytes)
    except Exception:  # noqa: BLE001
        return 64 << 20  # conservative: v7x per-core VMEM


# Can this jax build single-buffer a BlockSpec (constant index_map operands)?
try:
    pl.BlockSpec((8, 128), lambda i: (0, 0), pipeline_mode=pl.Buffered(1))
    _SINGLE_BUFFER_OK = True
except Exception:  # noqa: BLE001 - older jax without pipeline_mode / Buffered
    _SINGLE_BUFFER_OK = False


# ----------------------------------------------------------------------------
# Pallas kernel: one batch tile through the whole masked MLP.
# ----------------------------------------------------------------------------
def _made_kernel(n_layers, x_ref, *refs):
    # refs layout: (w_ref, b_ref) * n_layers, out_ref
    # w_ref: [in_pad, out_pad]  (mask already folded in, pre-transposed)
    # b_ref: [1, out_pad]       (float32)
    out_ref = refs[-1]

    h = x_ref[...]
    for i in range(n_layers):
        w = refs[2 * i][...]
        b = refs[2 * i + 1][...]
        if i > 0:
            # LeakyReLU(0.01) between hidden layers; h is f32 here (VPU-safe
            # on v5e which lacks bf16 VPU support).
            h = jnp.where(h >= 0, h, 0.01 * h)
        # F.linear(h, w*m, b) == h @ (w*m).T + b ; w is already (w*m).T.
        # MXU operands in weights dtype (bf16 or f32); accumulate in f32.
        h = lax.dot_general(
            h.astype(w.dtype), w,
            dimension_numbers=(((1,), (0,)), ((), ())),
            preferred_element_type=jnp.float32,
        ) + b
    out_ref[...] = h.astype(out_ref.dtype)


# ----------------------------------------------------------------------------
# Wrapper: fold masks, transpose, pad, batch-tile, launch.
# ----------------------------------------------------------------------------
def made_forward(x, weights, masks, biases, *, weights_dtype=jnp.float32,
                 tile_b_max=2048):
    """Runs the MADE forward pass as a batch-tiled Pallas TPU kernel."""
    n_layers = len(weights)
    B, D = x.shape
    E = weights[-1].shape[0]
    act_dtype = jnp.dtype(weights_dtype)
    act_itemsize = act_dtype.itemsize

    # --- fold masks into weights, transpose to [in, out], pad to 128 lanes ---
    dims = [D] + [w.shape[0] for w in weights]
    dims_pad = [_round_up(d, 128) for d in dims]
    D_pad, E_pad = dims_pad[0], dims_pad[-1]

    wms, bps = [], []
    for li, (w, m, b) in enumerate(zip(weights, masks, biases)):
        wm = (w * m).T                                # [in, out], mask folded in
        in_p, out_p = dims_pad[li], dims_pad[li + 1]
        wm = jnp.pad(wm, ((0, in_p - wm.shape[0]), (0, out_p - wm.shape[1])))
        wms.append(wm.astype(act_dtype))
        bp = jnp.pad(b, (0, out_p - b.shape[0])).reshape(1, out_p)
        bps.append(bp.astype(jnp.float32))            # padded bias entries are 0

    weight_bytes = sum(int(np.prod(w.shape)) * act_itemsize for w in wms)
    bias_bytes = sum(int(np.prod(b.shape)) * 4 for b in bps)
    max_feat = max(dims_pad)

    # --- generation-aware VMEM budgeting ------------------------------------
    vmem_cap = _vmem_capacity_bytes()
    budget = int(0.72 * vmem_cap)        # ~92 MiB v5e/v6e, ~46 MiB v7x

    def footprint(tb):
        # Conservative: count resident weights/biases at 2x even when
        # pl.Buffered(1) is requested (extra headroom, never under-counts).
        act = 2 * tb * (D_pad + E_pad) * act_itemsize   # pipelined in/out tiles
        hidden = 2 * tb * max_feat * 4                  # f32 intermediates
        return 2 * (weight_bytes + bias_bytes) + act + hidden

    # TODO(synk): if any hidden layer is too large to stay VMEM-resident
    # (e.g. >= 2048 on v7x), tile the out-feature dim on a second grid axis
    # with an accumulator, or stream weights via pltpu.emit_pipeline.

    # --- batch tile: sublane-aligned, VMEM-fitting, >=2 steps, divides B ----
    sub = 16 if act_dtype == jnp.bfloat16 else 8
    B_aligned = _round_up(B, sub)
    tile_b = min(_round_up(tile_b_max, sub), B_aligned)
    while tile_b > sub and footprint(tile_b) > budget:
        tile_b = max(sub, ((tile_b // 2) // sub) * sub)

    # Guarantee >= 2 grid steps when the batch spans more than one sublane
    # tile (feeds both v7x TensorCores; negligible on v5e/v6e).
    if B_aligned > sub and tile_b >= B_aligned:
        tile_b = max(sub, _round_up((B_aligned + 1) // 2, sub))

    # Prefer a tile that divides B exactly -> no batch padding and no
    # post-kernel slice copy on the batch dimension.
    if B % sub == 0 and B % tile_b != 0:
        d = (tile_b // sub) * sub
        while d > sub and B % d != 0:
            d -= sub
        tile_b = d

    B_pad = _round_up(B, tile_b)
    n_tiles = B_pad // tile_b

    x_pad = x.astype(act_dtype)
    if B_pad != B or D_pad != D:
        x_pad = jnp.pad(x_pad, ((0, B_pad - B), (0, D_pad - D)))

    out_shape = jax.ShapeDtypeStruct((B_pad, E_pad), act_dtype)

    vmem_limit = max(32 << 20,
                     min(int(1.25 * footprint(tile_b)) + (4 << 20),
                         vmem_cap - (16 << 20)))

    flops = 2 * B_pad * sum(a * b for a, b in zip(dims_pad[:-1], dims_pad[1:]))
    bytes_accessed = (B_pad * (D_pad + E_pad) * act_itemsize
                      + weight_bytes + bias_bytes)
    cost = pl.CostEstimate(flops=flops, transcendentals=0,
                           bytes_accessed=bytes_accessed)

    kernel = functools.partial(_made_kernel, n_layers)

    def _resident_spec(shape, single):
        if single and _SINGLE_BUFFER_OK:
            return pl.BlockSpec(shape, lambda i: (0, 0),
                                pipeline_mode=pl.Buffered(1))
        return pl.BlockSpec(shape, lambda i: (0, 0))

    def _launch(single_buffer_weights):
        args = [x_pad]
        in_specs = [pl.BlockSpec((tile_b, D_pad), lambda i: (i, 0))]
        for wm, bp in zip(wms, bps):
            args.extend([wm, bp])
            in_specs.append(_resident_spec(wm.shape, single_buffer_weights))
            in_specs.append(_resident_spec(bp.shape, single_buffer_weights))
        return pl.pallas_call(
            kernel,
            grid=(n_tiles,),
            in_specs=in_specs,
            out_specs=pl.BlockSpec((tile_b, E_pad), lambda i: (i, 0)),
            out_shape=out_shape,
            compiler_params=pltpu.CompilerParams(
                dimension_semantics=("parallel",),
                vmem_limit_bytes=int(vmem_limit),
            ),
            cost_estimate=cost,
        )(*args)

    if _SINGLE_BUFFER_OK:
        try:
            out = _launch(True)
        except Exception:  # noqa: BLE001 - Mosaic rejected Buffered(1); retry
            out = _launch(False)
    else:
        out = _launch(False)

    # slice away padding only when it exists (avoids an extra HBM copy)
    if B_pad != B or E_pad != E:
        out = out[:B, :E]
    return out


# ----------------------------------------------------------------------------
# Pure-JAX reference (for correctness check)
# ----------------------------------------------------------------------------
def made_forward_ref(x, weights, masks, biases):
    h = x
    for i, (w, m, b) in enumerate(zip(weights, masks, biases)):
        if i > 0:
            h = jnp.where(h >= 0, h, 0.01 * h)
        h = h @ (w * m).T + b
    return h


if __name__ == "__main__":
    # MADE with input dim 8, two hidden layers of 32, output dim 16 (= 2 * D)
    dims = (8, 32, 32, 16)
    batch = 2

    key = jax.random.PRNGKey(0)
    key, kx = jax.random.split(key)
    x = jax.random.normal(kx, (batch, dims[0]), dtype=jnp.float32)

    masks = build_made_masks(dims)
    weights, biases = init_made_params(key, dims)

    ref = made_forward_ref(x, weights, masks, biases)

    # f32 path (default): strict check against the reference.
    out = jax.block_until_ready(made_forward(x, weights, masks, biases))
    np.testing.assert_allclose(np.asarray(out), np.asarray(ref),
                               rtol=1e-5, atol=1e-5)

    # bf16 path (recommended on v6e/v7x): halves streamed activation bytes and
    # resident weight VMEM; numerics checked loosely against the f32 reference.
    out_bf16 = jax.block_until_ready(
        made_forward(x, weights, masks, biases, weights_dtype=jnp.bfloat16))
    np.testing.assert_allclose(np.asarray(out_bf16).astype(np.float32),
                               np.asarray(ref), rtol=5e-2, atol=5e-2)

    print("KERNEL_OK")
</pallas_src>

<mosaic_0001>
module attributes {stable_mosaic.version = 11 : i64} {
  func.func @_made_kernel(%arg0: i32, %arg1: memref<8x128xf32, #tpu.memory_space<vmem>>, %arg2: memref<128x128xf32, #tpu.memory_space<vmem>>, %arg3: memref<1x128xf32, #tpu.memory_space<vmem>>, %arg4: memref<128x128xf32, #tpu.memory_space<vmem>>, %arg5: memref<1x128xf32, #tpu.memory_space<vmem>>, %arg6: memref<128x128xf32, #tpu.memory_space<vmem>>, %arg7: memref<1x128xf32, #tpu.memory_space<vmem>>, %arg8: memref<8x128xf32, #tpu.memory_space<vmem>>) attributes {dimension_semantics = [#tpu.dimension_semantics<parallel>], iteration_bounds = array<i64: 1>, scalar_prefetch = 0 : i64, scratch_operands = 0 : i64, tpu.core_type = #tpu.core_type<tc>, window_params = [{transform_indices = @transform_0, window_bounds = array<i64: 8, 128>}, {pipeline_mode = #tpu.pipeline_mode<synchronous>, transform_indices = @transform_1, window_bounds = array<i64: 128, 128>}, {pipeline_mode = #tpu.pipeline_mode<synchronous>, transform_indices = @transform_2, window_bounds = array<i64: 1, 128>}, {pipeline_mode = #tpu.pipeline_mode<synchronous>, transform_indices = @transform_3, window_bounds = array<i64: 128, 128>}, {pipeline_mode = #tpu.pipeline_mode<synchronous>, transform_indices = @transform_4, window_bounds = array<i64: 1, 128>}, {pipeline_mode = #tpu.pipeline_mode<synchronous>, transform_indices = @transform_5, window_bounds = array<i64: 128, 128>}, {pipeline_mode = #tpu.pipeline_mode<synchronous>, transform_indices = @transform_6, window_bounds = array<i64: 1, 128>}, {transform_indices = @transform_7, window_bounds = array<i64: 8, 128>}]} {
    %c0 = arith.constant 0 : index
    %c0_0 = arith.constant 0 : index
    %0 = vector.load %arg1[%c0, %c0_0] : memref<8x128xf32, #tpu.memory_space<vmem>>, vector<8x128xf32>
    %c0_1 = arith.constant 0 : index
    %c0_2 = arith.constant 0 : index
    %1 = vector.load %arg2[%c0_1, %c0_2] : memref<128x128xf32, #tpu.memory_space<vmem>>, vector<128x128xf32>
    %c0_3 = arith.constant 0 : index
    %c0_4 = arith.constant 0 : index
    %2 = vector.load %arg3[%c0_3, %c0_4] : memref<1x128xf32, #tpu.memory_space<vmem>>, vector<1x128xf32>
    %cst = arith.constant dense<0.000000e+00> : vector<8x128xf32>
    %3 = tpu.matmul %0, %1, %cst {dimension_numbers = #tpu.dot_dimension_numbers<[1], [0], [0], [1], [0, 0, 1, 1], [], []>} : vector<8x128xf32>, vector<128x128xf32>, vector<8x128xf32> -> vector<8x128xf32>
    %4 = vector.broadcast %2 : vector<1x128xf32> to vector<8x128xf32>
    %5 = arith.addf %3, %4 : vector<8x128xf32>
    %c0_5 = arith.constant 0 : index
    %c0_6 = arith.constant 0 : index
    %6 = vector.load %arg4[%c0_5, %c0_6] : memref<128x128xf32, #tpu.memory_space<vmem>>, vector<128x128xf32>
    %c0_7 = arith.constant 0 : index
    %c0_8 = arith.constant 0 : index
    %7 = vector.load %arg5[%c0_7, %c0_8] : memref<1x128xf32, #tpu.memory_space<vmem>>, vector<1x128xf32>
    %cst_9 = arith.constant 0.000000e+00 : f32
    %8 = vector.broadcast %cst_9 : f32 to vector<8x128xf32>
    %9 = arith.cmpf oge, %5, %8 : vector<8x128xf32>
    %cst_10 = arith.constant 0.00999999977 : f32
    %10 = vector.broadcast %cst_10 : f32 to vector<8x128xf32>
    %11 = arith.mulf %10, %5 : vector<8x128xf32>
    %12 = arith.select %9, %5, %11 : vector<8x128xi1>, vector<8x128xf32>
    %cst_11 = arith.constant dense<0.000000e+00> : vector<8x128xf32>
    %13 = tpu.matmul %12, %6, %cst_11 {dimension_numbers = #tpu.dot_dimension_numbers<[1], [0], [0], [1], [0, 0, 1, 1], [], []>} : vector<8x128xf32>, vector<128x128xf32>, vector<8x128xf32> -> vector<8x128xf32>
    %14 = vector.broadcast %7 : vector<1x128xf32> to vector<8x128xf32>
    %15 = arith.addf %13, %14 : vector<8x128xf32>
    %c0_12 = arith.constant 0 : index
    %c0_13 = arith.constant 0 : index
    %16 = vector.load %arg6[%c0_12, %c0_13] : memref<128x128xf32, #tpu.memory_space<vmem>>, vector<128x128xf32>
    %c0_14 = arith.constant 0 : index
    %c0_15 = arith.constant 0 : index
    %17 = vector.load %arg7[%c0_14, %c0_15] : memref<1x128xf32, #tpu.memory_space<vmem>>, vector<1x128xf32>
    %cst_16 = arith.constant 0.000000e+00 : f32
    %18 = vector.broadcast %cst_16 : f32 to vector<8x128xf32>
    %19 = arith.cmpf oge, %15, %18 : vector<8x128xf32>
    %cst_17 = arith.constant 0.00999999977 : f32
    %20 = vector.broadcast %cst_17 : f32 to vector<8x128xf32>
    %21 = arith.mulf %20, %15 : vector<8x128xf32>
    %22 = arith.select %19, %15, %21 : vector<8x128xi1>, vector<8x128xf32>
    %cst_18 = arith.constant dense<0.000000e+00> : vector<8x128xf32>
    %23 = tpu.matmul %22, %16, %cst_18 {dimension_numbers = #tpu.dot_dimension_numbers<[1], [0], [0], [1], [0, 0, 1, 1], [], []>} : vector<8x128xf32>, vector<128x128xf32>, vector<8x128xf32> -> vector<8x128xf32>
    %24 = vector.broadcast %17 : vector<1x128xf32> to vector<8x128xf32>
    %25 = arith.addf %23, %24 : vector<8x128xf32>
    %c0_19 = arith.constant 0 : index
    %c0_20 = arith.constant 0 : index
    %26 = vector.load %arg8[%c0_19, %c0_20] : memref<8x128xf32, #tpu.memory_space<vmem>>, vector<8x128xf32>
    tpu.vector_store %arg8[%c0_19, %c0_20], %25 {strides = array<i32>} : memref<8x128xf32, #tpu.memory_space<vmem>>, vector<8x128xf32>,
    return
  }
  func.func @transform_0(%arg0: i32) -> (i32, i32) {
    %c0_i32 = arith.constant 0 : i32
    %c0_i32_0 = arith.constant 0 : i32
    return %arg0, %c0_i32 : i32, i32
  }
  func.func @transform_1(%arg0: i32) -> (i32, i32) {
    %c0_i32 = arith.constant 0 : i32
    %c0_i32_0 = arith.constant 0 : i32
    %c0_i32_1 = arith.constant 0 : i32
    return %c0_i32, %c0_i32_0 : i32, i32
  }
  func.func @transform_2(%arg0: i32) -> (i32, i32) {
    %c0_i32 = arith.constant 0 : i32
    %c0_i32_0 = arith.constant 0 : i32
    %c0_i32_1 = arith.constant 0 : i32
    return %c0_i32, %c0_i32_0 : i32, i32
  }
  func.func @transform_3(%arg0: i32) -> (i32, i32) {
    %c0_i32 = arith.constant 0 : i32
    %c0_i32_0 = arith.constant 0 : i32
    %c0_i32_1 = arith.constant 0 : i32
    return %c0_i32, %c0_i32_0 : i32, i32
  }
  func.func @transform_4(%arg0: i32) -> (i32, i32) {
    %c0_i32 = arith.constant 0 : i32
    %c0_i32_0 = arith.constant 0 : i32
    %c0_i32_1 = arith.constant 0 : i32
    return %c0_i32, %c0_i32_0 : i32, i32
  }
  func.func @transform_5(%arg0: i32) -> (i32, i32) {
    %c0_i32 = arith.constant 0 : i32
    %c0_i32_0 = arith.constant 0 : i32
    %c0_i32_1 = arith.constant 0 : i32
    return %c0_i32, %c0_i32_0 : i32, i32
  }
  func.func @transform_6(%arg0: i32) -> (i32, i32) {
    %c0_i32 = arith.constant 0 : i32
    %c0_i32_0 = arith.constant 0 : i32
    %c0_i32_1 = arith.constant 0 : i32
    return %c0_i32, %c0_i32_0 : i32, i32
  }
  func.func @transform_7(%arg0: i32) -> (i32, i32) {
    %c0_i32 = arith.constant 0 : i32
    %c0_i32_0 = arith.constant 0 : i32
    return %arg0, %c0_i32 : i32, i32
  }
}

module attributes {stable_mosaic.version = 11 : i64} {
  func.func @_made_kernel(%arg0: i32, %arg1: memref<8x128xf32, #tpu.memory_space<vmem>>, %arg2: memref<128x128xf32, #tpu.memory_space<vmem>>, %arg3: memref<1x128xf32, #tpu.memory_space<vmem>>, %arg4: memref<128x128xf32, #tpu.memory_space<vmem>>, %arg5: memref<1x128xf32, #tpu.memory_space<vmem>>, %arg6: memref<128x128xf32, #tpu.memory_space<vmem>>, %arg7: memref<1x128xf32, #tpu.memory_space<vmem>>, %arg8: memref<8x128xf32, #tpu.memory_space<vmem>>) attributes {dimension_semantics = [#tpu.dimension_semantics<parallel>], iteration_bounds = array<i64: 1>, scalar_prefetch = 0 : i64, scratch_operands = 0 : i64, tpu.core_type = #tpu.core_type<tc>, window_params = [{transform_indices = @transform_0, window_bounds = array<i64: 8, 128>}, {pipeline_mode = #tpu.pipeline_mode<synchronous>, transform_indices = @transform_1, window_bounds = array<i64: 128, 128>}, {pipeline_mode = #tpu.pipeline_mode<synchronous>, transform_indices = @transform_2, window_bounds = array<i64: 1, 128>}, {pipeline_mode = #tpu.pipeline_mode<synchronous>, transform_indices = @transform_3, window_bounds = array<i64: 128, 128>}, {pipeline_mode = #tpu.pipeline_mode<synchronous>, transform_indices = @transform_4, window_bounds = array<i64: 1, 128>}, {pipeline_mode = #tpu.pipeline_mode<synchronous>, transform_indices = @transform_5, window_bounds = array<i64: 128, 128>}, {pipeline_mode = #tpu.pipeline_mode<synchronous>, transform_indices = @transform_6, window_bounds = array<i64: 1, 128>}, {transform_indices = @transform_7, window_bounds = array<i64: 8, 128>}]} {
    %c0 = arith.constant 0 : index
    %c0_0 = arith.constant 0 : index
    %0 = vector.load %arg1[%c0, %c0_0] : memref<8x128xf32, #tpu.memory_space<vmem>>, vector<8x128xf32>
    %c0_1 = arith.constant 0 : index
    %c0_2 = arith.constant 0 : index
    %1 = vector.load %arg2[%c0_1, %c0_2] : memref<128x128xf32, #tpu.memory_space<vmem>>, vector<128x128xf32>
    %c0_3 = arith.constant 0 : index
    %c0_4 = arith.constant 0 : index
    %2 = vector.load %arg3[%c0_3, %c0_4] : memref<1x128xf32, #tpu.memory_space<vmem>>, vector<1x128xf32>
    %cst = arith.constant dense<0.000000e+00> : vector<8x128xf32>
    %3 = tpu.matmul %0, %1, %cst {dimension_numbers = #tpu.dot_dimension_numbers<[1], [0], [0], [1], [0, 0, 1, 1], [], []>} : vector<8x128xf32>, vector<128x128xf32>, vector<8x128xf32> -> vector<8x128xf32>
    %4 = vector.broadcast %2 : vector<1x128xf32> to vector<8x128xf32>
    %5 = arith.addf %3, %4 : vector<8x128xf32>
    %c0_5 = arith.constant 0 : index
    %c0_6 = arith.constant 0 : index
    %6 = vector.load %arg4[%c0_5, %c0_6] : memref<128x128xf32, #tpu.memory_space<vmem>>, vector<128x128xf32>
    %c0_7 = arith.constant 0 : index
    %c0_8 = arith.constant 0 : index
    %7 = vector.load %arg5[%c0_7, %c0_8] : memref<1x128xf32, #tpu.memory_space<vmem>>, vector<1x128xf32>
    %cst_9 = arith.constant 0.000000e+00 : f32
    %8 = vector.broadcast %cst_9 : f32 to vector<8x128xf32>
    %9 = arith.cmpf oge, %5, %8 : vector<8x128xf32>
    %cst_10 = arith.constant 0.00999999977 : f32
    %10 = vector.broadcast %cst_10 : f32 to vector<8x128xf32>
    %11 = arith.mulf %10, %5 : vector<8x128xf32>
    %12 = arith.select %9, %5, %11 : vector<8x128xi1>, vector<8x128xf32>
    %cst_11 = arith.constant dense<0.000000e+00> : vector<8x128xf32>
    %13 = tpu.matmul %12, %6, %cst_11 {dimension_numbers = #tpu.dot_dimension_numbers<[1], [0], [0], [1], [0, 0, 1, 1], [], []>} : vector<8x128xf32>, vector<128x128xf32>, vector<8x128xf32> -> vector<8x128xf32>
    %14 = vector.broadcast %7 : vector<1x128xf32> to vector<8x128xf32>
    %15 = arith.addf %13, %14 : vector<8x128xf32>
    %c0_12 = arith.constant 0 : index
    %c0_13 = arith.constant 0 : index
    %16 = vector.load %arg6[%c0_12, %c0_13] : memref<128x128xf32, #tpu.memory_space<vmem>>, vector<128x128xf32>
    %c0_14 = arith.constant 0 : index
    %c0_15 = arith.constant 0 : index
    %17 = vector.load %arg7[%c0_14, %c0_15] : memref<1x128xf32, #tpu.memory_space<vmem>>, vector<1x128xf32>
    %cst_16 = arith.constant 0.000000e+00 : f32
    %18 = vector.broadcast %cst_16 : f32 to vector<8x128xf32>
    %19 = arith.cmpf oge, %15, %18 : vector<8x128xf32>
    %cst_17 = arith.constant 0.00999999977 : f32
    %20 = vector.broadcast %cst_17 : f32 to vector<8x128xf32>
    %21 = arith.mulf %20, %15 : vector<8x128xf32>
    %22 = arith.select %19, %15, %21 : vector<8x128xi1>, vector<8x128xf32>
    %cst_18 = arith.constant dense<0.000000e+00> : vector<8x128xf32>
    %23 = tpu.matmul %22, %16, %cst_18 {dimension_numbers = #tpu.dot_dimension_numbers<[1], [0], [0], [1], [0, 0, 1, 1], [], []>} : vector<8x128xf32>, vector<128x128xf32>, vector<8x128xf32> -> vector<8x128xf32>
    %24 = vector.broadcast %17 : vector<1x128xf32> to vector<8x128xf32>
    %25 = arith.addf %23, %24 : vector<8x128xf32>
    %c0_19 = arith.constant 0 : index
    %c0_20 = arith.constant 0 : index
    %26 = vector.load %arg8[%c0_19, %c0_20] : memref<8x128xf32, #tpu.memory_space<vmem>>, vector<8x128xf32>
    tpu.vector_store %arg8[%c0_19, %c0_20], %25 {strides = array<i32>} : memref<8x128xf32, #tpu.memory_space<vmem>>, vector<8x128xf32>,
    return
  }
  func.func @transform_0(%arg0: i32) -> (i32, i32) {
    %c0_i32 = arith.constant 0 : i32
    %c0_i32_0 = arith.constant 0 : i32
    return %arg0, %c0_i32 : i32, i32
  }
  func.func @transform_1(%arg0: i32) -> (i32, i32) {
    %c0_i32 = arith.constant 0 : i32
    %c0_i32_0 = arith.constant 0 : i32
    %c0_i32_1 = arith.constant 0 : i32
    return %c0_i32, %c0_i32_0 : i32, i32
  }
  func.func @transform_2(%arg0: i32) -> (i32, i32) {
    %c0_i32 = arith.constant 0 : i32
    %c0_i32_0 = arith.constant 0 : i32
    %c0_i32_1 = arith.constant 0 : i32
    return %c0_i32, %c0_i32_0 : i32, i32
  }
  func.func @transform_3(%arg0: i32) -> (i32, i32) {
    %c0_i32 = arith.constant 0 : i32
    %c0_i32_0 = arith.constant 0 : i32
    %c0_i32_1 = arith.constant 0 : i32
    return %c0_i32, %c0_i32_0 : i32, i32
  }
  func.func @transform_4(%arg0: i32) -> (i32, i32) {
    %c0_i32 = arith.constant 0 : i32
    %c0_i32_0 = arith.constant 0 : i32
    %c0_i32_1 = arith.constant 0 : i32
    return %c0_i32, %c0_i32_0 : i32, i32
  }
  func.func @transform_5(%arg0: i32) -> (i32, i32) {
    %c0_i32 = arith.constant 0 : i32
    %c0_i32_0 = arith.constant 0 : i32
    %c0_i32_1 = arith.constant 0 : i32
    return %c0_i32, %c0_i32_0 : i32, i32
  }
  func.func @transform_6(%arg0: i32) -> (i32, i32) {
    %c0_i32 = arith.constant 0 : i32
    %c0_i32_0 = arith.constant 0 : i32
    %c0_i32_1 = arith.constant 0 : i32
    return %c0_i32, %c0_i32_0 : i32, i32
  }
  func.func @transform_7(%arg0: i32) -> (i32, i32) {
    %c0_i32 = arith.constant 0 : i32
    %c0_i32_0 = arith.constant 0 : i32
    return %arg0, %c0_i32 : i32, i32
  }
}

</mosaic_0001>

<llo_original>
// kernel: tpu_custom_call.1
$region0: #{tpu_custom_call.1}
  #allocation0 [shape = 'u32[]', space=smem, size = 0x4, offset = 0x4, fixed_abs, tag = 'smem constant byte address 0x4 - core index']
  #allocation1 [shape = 'u32[144,128]{1,0:T(1,128)}', space=vmem, size = 0x12000, scoped, tag = 'internal scratch']
  %s0 = inlined_call_operand.hbm [shape: f32[8,128], index: 0, kind: input, shape index: {}]
  %s1 = inlined_call_operand.hbm [shape: f32[128,128], index: 1, kind: input, shape index: {}]
  %s2 = inlined_call_operand.vmem [shape: f32[1,128], index: 2, kind: input, shape index: {}]
  %s3 = inlined_call_operand.hbm [shape: f32[128,128], index: 3, kind: input, shape index: {}]
  %s4 = inlined_call_operand.vmem [shape: f32[1,128], index: 4, kind: input, shape index: {}]
  %s5 = inlined_call_operand.hbm [shape: f32[128,128], index: 5, kind: input, shape index: {}]
  %s6 = inlined_call_operand.vmem [shape: f32[1,128], index: 6, kind: input, shape index: {}]
  %s7 = inlined_call_operand.hbm [shape: f32[8,128], index: 7, kind: output, shape index: {}]
  %s8 = sld [smem:[#allocation0]]
  $region54: #{tpu_custom_call.1} parent=0
    _
  %s10 = ssub.s32 1, %s8
  %s11 = scalar_select 0, %s10, %s8
  $region1: #{tpu_custom_call.1} parent=0
    #allocation2 [shape = 'u8[4096]{0}', space=vmem, size = 0x1000, scoped, tag = 'input window, operand 0, single buffered']
    #allocation3 [shape = 's32[1]{0}', space=sflag, size = 0x4, scoped, tag = 'scoped memory for tpu_custom_call.1']
    #allocation4 [shape = 's32[1]{0}', space=sflag, size = 0x4, scoped, tag = 'scoped memory for tpu_custom_call.1']
    #allocation5 [shape = 'u8[65536]{0}', space=vmem, size = 0x10000, scoped, tag = 'input window, operand 1, single buffered']
    #allocation6 [shape = 's32[1]{0}', space=sflag, size = 0x4, scoped, tag = 'scoped memory for tpu_custom_call.1']
    #allocation7 [shape = 'u8[65536]{0}', space=vmem, size = 0x10000, scoped, tag = 'input window, operand 3, single buffered']
    #allocation8 [shape = 'u8[65536]{0}', space=vmem, size = 0x10000, scoped, tag = 'input window, operand 5, single buffered']
    #allocation9 [shape = 's32[1]{0}', space=sflag, size = 0x4, scoped, tag = 'scoped memory for tpu_custom_call.1']
    #allocation10 [shape = 'u8[4096]{0}', space=vmem, size = 0x1000, scoped, tag = 'output window, operand 0, single buffered']
    %12 = vsyncpa [#allocation3], 0
    %13 = vsyncpa [#allocation6], 0
    %14 = vsyncpa [#allocation9], 0
    %15 = vsyncpa [#allocation4], 0
    // Predicated region
    $region2: #{tpu_custom_call.1} parent=1 // pred_check
      _
    $region3: #{tpu_custom_call.1} parent=1 // pred_check_branch
      %17 = sbr.rel (0) target = $region5
    $region4: #{tpu_custom_call.1} parent=1 // pred_region
      %s19 = ssub.s32 128, 128
      %20 = vsyncadd [#allocation3], %s19
      %s22 = sshll.u32 [#allocation2], 4
      %s23 = int_to_ptr.vmem [resolvable:$true] %s22
      %25 = dma.hbm_to_vmem [thread:$0]  %s0, 128, %s23, [#allocation3]
    $region5: #{tpu_custom_call.1} parent=1 // pred_fallthru
      _
    // Predicated region
    $region6: #{tpu_custom_call.1} parent=1 // pred_check
      _
    $region7: #{tpu_custom_call.1} parent=1 // pred_check_branch
      %27 = sbr.rel (0) target = $region9
    $region8: #{tpu_custom_call.1} parent=1 // pred_region
      %s29 = ssub.s32 2048, 2048
      %30 = vsyncadd [#allocation6], %s29
      %s31 = sshll.u32 [#allocation5], 4
      %s32 = int_to_ptr.vmem [resolvable:$true] %s31
      %37 = dma.hbm_to_vmem [thread:$0]  %s1, 2048, %s32, [#allocation6], 128, 128, 8
    $region9: #{tpu_custom_call.1} parent=1 // pred_fallthru
      _
    // Predicated region
    $region10: #{tpu_custom_call.1} parent=1 // pred_check
      _
    $region11: #{tpu_custom_call.1} parent=1 // pred_check_branch
      %39 = sbr.rel (0) target = $region13
    $region12: #{tpu_custom_call.1} parent=1 // pred_region
      _
    $region13: #{tpu_custom_call.1} parent=1 // pred_fallthru
      _
    // Predicated region
    $region14: #{tpu_custom_call.1} parent=1 // pred_check
      _
    $region15: #{tpu_custom_call.1} parent=1 // pred_check_branch
      %41 = sbr.rel (0) target = $region17
    $region16: #{tpu_custom_call.1} parent=1 // pred_region
      %s43 = ssub.s32 2048, 2048
      %44 = vsyncadd [#allocation6], %s43
      %s45 = sshll.u32 [#allocation7], 4
      %s46 = int_to_ptr.vmem [resolvable:$true] %s45
      %51 = dma.hbm_to_vmem [thread:$0]  %s3, 2048, %s46, [#allocation6], 128, 128, 8
    $region17: #{tpu_custom_call.1} parent=1 // pred_fallthru
      _
    // Predicated region
    $region18: #{tpu_custom_call.1} parent=1 // pred_check
      _
    $region19: #{tpu_custom_call.1} parent=1 // pred_check_branch
      %53 = sbr.rel (0) target = $region21
    $region20: #{tpu_custom_call.1} parent=1 // pred_region
      _
    $region21: #{tpu_custom_call.1} parent=1 // pred_fallthru
      _
    // Predicated region
    $region22: #{tpu_custom_call.1} parent=1 // pred_check
      _
    $region23: #{tpu_custom_call.1} parent=1 // pred_check_branch
      %55 = sbr.rel (0) target = $region25
    $region24: #{tpu_custom_call.1} parent=1 // pred_region
      %s57 = ssub.s32 2048, 2048
      %58 = vsyncadd [#allocation9], %s57
      %s59 = sshll.u32 [#allocation8], 4
      %s60 = int_to_ptr.vmem [resolvable:$true] %s59
      %65 = dma.hbm_to_vmem [thread:$0]  %s5, 2048, %s60, [#allocation9], 128, 128, 8
    $region25: #{tpu_custom_call.1} parent=1 // pred_fallthru
      _
    // Predicated region
    $region26: #{tpu_custom_call.1} parent=1 // pred_check
      _
    $region27: #{tpu_custom_call.1} parent=1 // pred_check_branch
      %67 = sbr.rel (0) target = $region29
    $region28: #{tpu_custom_call.1} parent=1 // pred_region
      _
    $region29: #{tpu_custom_call.1} parent=1 // pred_fallthru
      _
    // Predicated region
    $region30: #{tpu_custom_call.1} parent=1 // pred_check
      _
    $region31: #{tpu_custom_call.1} parent=1 // pred_check_branch
      %69 = sbr.rel (0) target = $region33
    $region32: #{tpu_custom_call.1} parent=1 // pred_region
      %70 = dma.done [#allocation3], 128
    $region33: #{tpu_custom_call.1} parent=1 // pred_fallthru
      _
    // Predicated region
    $region34: #{tpu_custom_call.1} parent=1 // pred_check
      _
    $region35: #{tpu_custom_call.1} parent=1 // pred_check_branch
      %72 = sbr.rel (0) target = $region37
    $region36: #{tpu_custom_call.1} parent=1 // pred_region
      %73 = dma.done [#allocation6], 2048
    $region37: #{tpu_custom_call.1} parent=1 // pred_fallthru
      _
    // Predicated region
    $region38: #{tpu_custom_call.1} parent=1 // pred_check
      _
    $region39: #{tpu_custom_call.1} parent=1 // pred_check_branch
      %75 = sbr.rel (0) target = $region41
    $region40: #{tpu_custom_call.1} parent=1 // pred_region
      %76 = dma.done [#allocation6], 2048
    $region41: #{tpu_custom_call.1} parent=1 // pred_fallthru
      _
    // Predicated region
    $region42: #{tpu_custom_call.1} parent=1 // pred_check
      _
    $region43: #{tpu_custom_call.1} parent=1 // pred_check_branch
      %78 = sbr.rel (0) target = $region45
    $region44: #{tpu_custom_call.1} parent=1 // pred_region
      %79 = dma.done [#allocation9], 2048
    $region45: #{tpu_custom_call.1} parent=1 // pred_fallthru
      _
    %v80 = vld [vmem:[#allocation2] sm:$0xff]
    %v81 = vld [vmem:[#allocation5] sm:$0xff]
    %v82 = vld [vmem:[#allocation5 + $0x8] sm:$0xff]
    %v83 = vld [vmem:[#allocation5 + $0x10] sm:$0xff]
    %v84 = vld [vmem:[#allocation5 + $0x18] sm:$0xff]
    %v85 = vld [vmem:[#allocation5 + $0x20] sm:$0xff]
    %v86 = vld [vmem:[#allocation5 + $0x28] sm:$0xff]
    %v87 = vld [vmem:[#allocation5 + $0x30] sm:$0xff]
    %v88 = vld [vmem:[#allocation5 + $0x38] sm:$0xff]
    %v89 = vld [vmem:[#allocation5 + $0x40] sm:$0xff]
    %v90 = vld [vmem:[#allocation5 + $0x48] sm:$0xff]
    %v91 = vld [vmem:[#allocation5 + $0x50] sm:$0xff]
    %v92 = vld [vmem:[#allocation5 + $0x58] sm:$0xff]
    %v93 = vld [vmem:[#allocation5 + $0x60] sm:$0xff]
    %v94 = vld [vmem:[#allocation5 + $0x68] sm:$0xff]
    %v95 = vld [vmem:[#allocation5 + $0x70] sm:$0xff]
    %v96 = vld [vmem:[#allocation5 + $0x78] sm:$0xff]
    %v97 = vld [vmem:[%s2] sm:$0x1]
    %v99 = vlaneseq
    %v100 = vshrl.u32 %v99, 7
    %v101 = vsub.s32 0, %v100
    %v102 = vrot.slane %v97, %v101
    %104 = vmatprep.subr.mxu0 0.0
    %105 = vmatpush1.msra.mxu0 %v96
    %106 = vmatprep.subr.mxu0 0.0
    %107 = vmatpush1.msra.mxu0 %v95
    %108 = vmatprep.subr.mxu0 0.0
    %109 = vmatpush1.msra.mxu0 %v94
    %110 = vmatprep.subr.mxu0 0.0
    %111 = vmatpush1.msra.mxu0 %v93
    %112 = vmatprep.subr.mxu0 0.0
    %113 = vmatpush1.msra.mxu0 %v92
    %114 = vmatprep.subr.mxu0 0.0
    %115 = vmatpush1.msra.mxu0 %v91
    %116 = vmatprep.subr.mxu0 0.0
    %117 = vmatpush1.msra.mxu0 %v90
    %118 = vmatprep.subr.mxu0 0.0
    %119 = vmatpush1.msra.mxu0 %v89
    %120 = vmatprep.subr.mxu0 0.0
    %121 = vmatpush1.msra.mxu0 %v88
    %122 = vmatprep.subr.mxu0 0.0
    %123 = vmatpush1.msra.mxu0 %v87
    %124 = vmatprep.subr.mxu0 0.0
    %125 = vmatpush1.msra.mxu0 %v86
    %126 = vmatprep.subr.mxu0 0.0
    %127 = vmatpush1.msra.mxu0 %v85
    %128 = vmatprep.subr.mxu0 0.0
    %129 = vmatpush1.msra.mxu0 %v84
    %130 = vmatprep.subr.mxu0 0.0
    %131 = vmatpush1.msra.mxu0 %v83
    %132 = vmatprep.subr.mxu0 0.0
    %133 = vmatpush1.msra.mxu0 %v82
    %134 = vmatprep.subr.mxu0 0.0
    %135 = vmatpush1.msra.mxu0 %v81
    %136 = vmatprep.subr.mxu0 0.0
    %137 = vmatpush2.msra.mxu0 0.0
    %138 = vmatprep.subr.mxu0 0.0
    %139 = vmatpush2.msra.mxu0 0.0
    %140 = vmatprep.subr.mxu0 0.0
    %141 = vmatpush2.msra.mxu0 0.0
    %142 = vmatprep.subr.mxu0 0.0
    %143 = vmatpush2.msra.mxu0 0.0
    %144 = vmatprep.subr.mxu0 0.0
    %145 = vmatpush2.msra.mxu0 0.0
    %146 = vmatprep.subr.mxu0 0.0
    %147 = vmatpush2.msra.mxu0 0.0
    %148 = vmatprep.subr.mxu0 0.0
    %149 = vmatpush2.msra.mxu0 0.0
    %150 = vmatprep.subr.mxu0 0.0
    %151 = vmatpush2.msra.mxu0 0.0
    %152 = vmatprep.subr.mxu0 0.0
    %153 = vmatpush2.msra.mxu0 0.0
    %154 = vmatprep.subr.mxu0 0.0
    %155 = vmatpush2.msra.mxu0 0.0
    %156 = vmatprep.subr.mxu0 0.0
    %157 = vmatpush2.msra.mxu0 0.0
    %158 = vmatprep.subr.mxu0 0.0
    %159 = vmatpush2.msra.mxu0 0.0
    %160 = vmatprep.subr.mxu0 0.0
    %161 = vmatpush2.msra.mxu0 0.0
    %162 = vmatprep.subr.mxu0 0.0
    %163 = vmatpush2.msra.mxu0 0.0
    %164 = vmatprep.subr.mxu0 0.0
    %165 = vmatpush2.msra.mxu0 0.0
    %166 = vmatprep.subr.mxu0 0.0
    %167 = vmatpush2.msra.mxu0 0.0
    %168 = vmatprep.mubr.f32.mxu0 0.0
    %169 = vmatmul.mubr.f32.gmra.mxu0 %v80
    %v170 = vpop.f32.mrf.mxu0
    %v171 = vadd.f32 %v102, %v170
    %v172 = vpop.f32.mrf.mxu0
    %173 = vdwg.mxu0
    %v174 = vld [vmem:[#allocation7] sm:$0xff]
    %v175 = vld [vmem:[#allocation7 + $0x8] sm:$0xff]
    %v176 = vld [vmem:[#allocation7 + $0x10] sm:$0xff]
    %v177 = vld [vmem:[#allocation7 + $0x18] sm:$0xff]
    %v178 = vld [vmem:[#allocation7 + $0x20] sm:$0xff]
    %v179 = vld [vmem:[#allocation7 + $0x28] sm:$0xff]
    %v180 = vld [vmem:[#allocation7 + $0x30] sm:$0xff]
    %v181 = vld [vmem:[#allocation7 + $0x38] sm:$0xff]
    %v182 = vld [vmem:[#allocation7 + $0x40] sm:$0xff]
    %v183 = vld [vmem:[#allocation7 + $0x48] sm:$0xff]
    %v184 = vld [vmem:[#allocation7 + $0x50] sm:$0xff]
    %v185 = vld [vmem:[#allocation7 + $0x58] sm:$0xff]
    %v186 = vld [vmem:[#allocation7 + $0x60] sm:$0xff]
    %v187 = vld [vmem:[#allocation7 + $0x68] sm:$0xff]
    %v188 = vld [vmem:[#allocation7 + $0x70] sm:$0xff]
    %v189 = vld [vmem:[#allocation7 + $0x78] sm:$0xff]
    %v190 = vld [vmem:[%s4] sm:$0x1]
    %vm191 = vcmp.ge.f32.partialorder %v171, 0.0
    %v192 = vmul.f32 %v171, 0.01
    %v193 = vsel %vm191, %v171, %v192
    %v195 = vlaneseq
    %v196 = vshrl.u32 %v195, 7
    %v197 = vsub.s32 0, %v196
    %v198 = vrot.slane %v190, %v197
    %200 = vmatprep.subr.mxu0 0.0
    %201 = vmatpush1.msra.mxu0 %v189
    %202 = vmatprep.subr.mxu0 0.0
    %203 = vmatpush1.msra.mxu0 %v188
    %204 = vmatprep.subr.mxu0 0.0
    %205 = vmatpush1.msra.mxu0 %v187
    %206 = vmatprep.subr.mxu0 0.0
    %207 = vmatpush1.msra.mxu0 %v186
    %208 = vmatprep.subr.mxu0 0.0
    %209 = vmatpush1.msra.mxu0 %v185
    %210 = vmatprep.subr.mxu0 0.0
    %211 = vmatpush1.msra.mxu0 %v184
    %212 = vmatprep.subr.mxu0 0.0
    %213 = vmatpush1.msra.mxu0 %v183
    %214 = vmatprep.subr.mxu0 0.0
    %215 = vmatpush1.msra.mxu0 %v182
    %216 = vmatprep.subr.mxu0 0.0
    %217 = vmatpush1.msra.mxu0 %v181
    %218 = vmatprep.subr.mxu0 0.0
    %219 = vmatpush1.msra.mxu0 %v180
    %220 = vmatprep.subr.mxu0 0.0
    %221 = vmatpush1.msra.mxu0 %v179
    %222 = vmatprep.subr.mxu0 0.0
    %223 = vmatpush1.msra.mxu0 %v178
    %224 = vmatprep.subr.mxu0 0.0
    %225 = vmatpush1.msra.mxu0 %v177
    %226 = vmatprep.subr.mxu0 0.0
    %227 = vmatpush1.msra.mxu0 %v176
    %228 = vmatprep.subr.mxu0 0.0
    %229 = vmatpush1.msra.mxu0 %v175
    %230 = vmatprep.subr.mxu0 0.0
    %231 = vmatpush1.msra.mxu0 %v174
    %232 = vmatprep.subr.mxu0 0.0
    %233 = vmatpush2.msra.mxu0 0.0
    %234 = vmatprep.subr.mxu0 0.0
    %235 = vmatpush2.msra.mxu0 0.0
    %236 = vmatprep.subr.mxu0 0.0
    %237 = vmatpush2.msra.mxu0 0.0
    %238 = vmatprep.subr.mxu0 0.0
    %239 = vmatpush2.msra.mxu0 0.0
    %240 = vmatprep.subr.mxu0 0.0
    %241 = vmatpush2.msra.mxu0 0.0
    %242 = vmatprep.subr.mxu0 0.0
    %243 = vmatpush2.msra.mxu0 0.0
    %244 = vmatprep.subr.mxu0 0.0
    %245 = vmatpush2.msra.mxu0 0.0
    %246 = vmatprep.subr.mxu0 0.0
    %247 = vmatpush2.msra.mxu0 0.0
    %248 = vmatprep.subr.mxu0 0.0
    %249 = vmatpush2.msra.mxu0 0.0
    %250 = vmatprep.subr.mxu0 0.0
    %251 = vmatpush2.msra.mxu0 0.0
    %252 = vmatprep.subr.mxu0 0.0
    %253 = vmatpush2.msra.mxu0 0.0
    %254 = vmatprep.subr.mxu0 0.0
    %255 = vmatpush2.msra.mxu0 0.0
    %256 = vmatprep.subr.mxu0 0.0
    %257 = vmatpush2.msra.mxu0 0.0
    %258 = vmatprep.subr.mxu0 0.0
    %259 = vmatpush2.msra.mxu0 0.0
    %260 = vmatprep.subr.mxu0 0.0
    %261 = vmatpush2.msra.mxu0 0.0
    %262 = vmatprep.subr.mxu0 0.0
    %263 = vmatpush2.msra.mxu0 0.0
    %264 = vmatprep.mubr.f32.mxu0 0.0
    %265 = vmatmul.mubr.f32.gmra.mxu0 %v193
    %v266 = vpop.f32.mrf.mxu0
    %v267 = vadd.f32 %v198, %v266
    %v268 = vpop.f32.mrf.mxu0
    %269 = vdwg.mxu0
    %v270 = vld [vmem:[#allocation8] sm:$0xff]
    %v271 = vld [vmem:[#allocation8 + $0x8] sm:$0xff]
    %v272 = vld [vmem:[#allocation8 + $0x10] sm:$0xff]
    %v273 = vld [vmem:[#allocation8 + $0x18] sm:$0xff]
    %v274 = vld [vmem:[#allocation8 + $0x20] sm:$0xff]
    %v275 = vld [vmem:[#allocation8 + $0x28] sm:$0xff]
    %v276 = vld [vmem:[#allocation8 + $0x30] sm:$0xff]
    %v277 = vld [vmem:[#allocation8 + $0x38] sm:$0xff]
    %v278 = vld [vmem:[#allocation8 + $0x40] sm:$0xff]
    %v279 = vld [vmem:[#allocation8 + $0x48] sm:$0xff]
    %v280 = vld [vmem:[#allocation8 + $0x50] sm:$0xff]
    %v281 = vld [vmem:[#allocation8 + $0x58] sm:$0xff]
    %v282 = vld [vmem:[#allocation8 + $0x60] sm:$0xff]
    %v283 = vld [vmem:[#allocation8 + $0x68] sm:$0xff]
    %v284 = vld [vmem:[#allocation8 + $0x70] sm:$0xff]
    %v285 = vld [vmem:[#allocation8 + $0x78] sm:$0xff]
    %v286 = vld [vmem:[%s6] sm:$0x1]
    %vm287 = vcmp.ge.f32.partialorder %v267, 0.0
    %v288 = vmul.f32 %v267, 0.01
    %v289 = vsel %vm287, %v267, %v288
    %v291 = vlaneseq
    %v292 = vshrl.u32 %v291, 7
    %v293 = vsub.s32 0, %v292
    %v294 = vrot.slane %v286, %v293
    %296 = vmatprep.subr.mxu0 0.0
    %297 = vmatpush1.msra.mxu0 %v285
    %298 = vmatprep.subr.mxu0 0.0
    %299 = vmatpush1.msra.mxu0 %v284
    %300 = vmatprep.subr.mxu0 0.0
    %301 = vmatpush1.msra.mxu0 %v283
    %302 = vmatprep.subr.mxu0 0.0
    %303 = vmatpush1.msra.mxu0 %v282
    %304 = vmatprep.subr.mxu0 0.0
    %305 = vmatpush1.msra.mxu0 %v281
    %306 = vmatprep.subr.mxu0 0.0
    %307 = vmatpush1.msra.mxu0 %v280
    %308 = vmatprep.subr.mxu0 0.0
    %309 = vmatpush1.msra.mxu0 %v279
    %310 = vmatprep.subr.mxu0 0.0
    %311 = vmatpush1.msra.mxu0 %v278
    %312 = vmatprep.subr.mxu0 0.0
    %313 = vmatpush1.msra.mxu0 %v277
    %314 = vmatprep.subr.mxu0 0.0
    %315 = vmatpush1.msra.mxu0 %v276
    %316 = vmatprep.subr.mxu0 0.0
    %317 = vmatpush1.msra.mxu0 %v275
    %318 = vmatprep.subr.mxu0 0.0
    %319 = vmatpush1.msra.mxu0 %v274
    %320 = vmatprep.subr.mxu0 0.0
    %321 = vmatpush1.msra.mxu0 %v273
    %322 = vmatprep.subr.mxu0 0.0
    %323 = vmatpush1.msra.mxu0 %v272
    %324 = vmatprep.subr.mxu0 0.0
    %325 = vmatpush1.msra.mxu0 %v271
    %326 = vmatprep.subr.mxu0 0.0
    %327 = vmatpush1.msra.mxu0 %v270
    %328 = vmatprep.subr.mxu0 0.0
    %329 = vmatpush2.msra.mxu0 0.0
    %330 = vmatprep.subr.mxu0 0.0
    %331 = vmatpush2.msra.mxu0 0.0
    %332 = vmatprep.subr.mxu0 0.0
    %333 = vmatpush2.msra.mxu0 0.0
    %334 = vmatprep.subr.mxu0 0.0
    %335 = vmatpush2.msra.mxu0 0.0
    %336 = vmatprep.subr.mxu0 0.0
    %337 = vmatpush2.msra.mxu0 0.0
    %338 = vmatprep.subr.mxu0 0.0
    %339 = vmatpush2.msra.mxu0 0.0
    %340 = vmatprep.subr.mxu0 0.0
    %341 = vmatpush2.msra.mxu0 0.0
    %342 = vmatprep.subr.mxu0 0.0
    %343 = vmatpush2.msra.mxu0 0.0
    %344 = vmatprep.subr.mxu0 0.0
    %345 = vmatpush2.msra.mxu0 0.0
    %346 = vmatprep.subr.mxu0 0.0
    %347 = vmatpush2.msra.mxu0 0.0
    %348 = vmatprep.subr.mxu0 0.0
    %349 = vmatpush2.msra.mxu0 0.0
    %350 = vmatprep.subr.mxu0 0.0
    %351 = vmatpush2.msra.mxu0 0.0
    %352 = vmatprep.subr.mxu0 0.0
    %353 = vmatpush2.msra.mxu0 0.0
    %354 = vmatprep.subr.mxu0 0.0
    %355 = vmatpush2.msra.mxu0 0.0
    %356 = vmatprep.subr.mxu0 0.0
    %357 = vmatpush2.msra.mxu0 0.0
    %358 = vmatprep.subr.mxu0 0.0
    %359 = vmatpush2.msra.mxu0 0.0
    %360 = vmatprep.mubr.f32.mxu0 0.0
    %361 = vmatmul.mubr.f32.gmra.mxu0 %v289
    %v362 = vpop.f32.mrf.mxu0
    %v363 = vadd.f32 %v294, %v362
    %v364 = vpop.f32.mrf.mxu0
    %365 = vdwg.mxu0
    %366 = vst [vmem:[#allocation10] sm:$0xff] %v363
    // Predicated region
    $region46: #{tpu_custom_call.1} parent=1 // pred_check
      _
    $region47: #{tpu_custom_call.1} parent=1 // pred_check_branch
      %368 = sbr.rel (0) target = $region49
    $region48: #{tpu_custom_call.1} parent=1 // pred_region
      %s370 = ssub.s32 128, 128
      %371 = vsyncadd [#allocation4], %s370
      %s373 = sshll.u32 [#allocation10], 4
      %s374 = int_to_ptr.vmem [resolvable:$true] %s373
      %376 = dma.vmem_to_hbm [thread:$0]  %s374, 128, %s7, [#allocation4]
    $region49: #{tpu_custom_call.1} parent=1 // pred_fallthru
      _
    // Predicated region
    $region50: #{tpu_custom_call.1} parent=1 // pred_check
      _
    $region51: #{tpu_custom_call.1} parent=1 // pred_check_branch
      %378 = sbr.rel (0) target = $region53
    $region52: #{tpu_custom_call.1} parent=1 // pred_region
      %379 = dma.done [#allocation4], 128
    $region53: #{tpu_custom_call.1} parent=1 // pred_fallthru
      _
    %380 = vsyncpa [#allocation3], 1
    %381 = vsyncpa [#allocation6], 1
    %382 = vsyncpa [#allocation9], 1
    %383 = vsyncpa [#allocation4], 1

// kernel: tpu_custom_call.1
$region0: #{tpu_custom_call.1}
  #allocation0 [shape = 'u32[]', space=smem, size = 0x4, offset = 0x4, fixed_abs, tag = 'smem constant byte address 0x4 - core index']
  #allocation1 [shape = 'u32[144,128]{1,0:T(1,128)}', space=vmem, size = 0x12000, scoped, tag = 'internal scratch']
  %s0 = inlined_call_operand.hbm [shape: f32[8,128], index: 0, kind: input, shape index: {}]
  %s1 = inlined_call_operand.hbm [shape: f32[128,128], index: 1, kind: input, shape index: {}]
  %s2 = inlined_call_operand.vmem [shape: f32[1,128], index: 2, kind: input, shape index: {}]
  %s3 = inlined_call_operand.hbm [shape: f32[128,128], index: 3, kind: input, shape index: {}]
  %s4 = inlined_call_operand.vmem [shape: f32[1,128], index: 4, kind: input, shape index: {}]
  %s5 = inlined_call_operand.hbm [shape: f32[128,128], index: 5, kind: input, shape index: {}]
  %s6 = inlined_call_operand.vmem [shape: f32[1,128], index: 6, kind: input, shape index: {}]
  %s7 = inlined_call_operand.hbm [shape: f32[8,128], index: 7, kind: output, shape index: {}]
  %s8 = sld [smem:[#allocation0]]
  $region54: #{tpu_custom_call.1} parent=0
    _
  %s10 = ssub.s32 1, %s8
  %s11 = scalar_select 0, %s10, %s8
  $region1: #{tpu_custom_call.1} parent=0
    #allocation2 [shape = 'u8[4096]{0}', space=vmem, size = 0x1000, scoped, tag = 'input window, operand 0, single buffered']
    #allocation3 [shape = 's32[1]{0}', space=sflag, size = 0x4, scoped, tag = 'scoped memory for tpu_custom_call.1']
    #allocation4 [shape = 's32[1]{0}', space=sflag, size = 0x4, scoped, tag = 'scoped memory for tpu_custom_call.1']
    #allocation5 [shape = 'u8[65536]{0}', space=vmem, size = 0x10000, scoped, tag = 'input window, operand 1, single buffered']
    #allocation6 [shape = 's32[1]{0}', space=sflag, size = 0x4, scoped, tag = 'scoped memory for tpu_custom_call.1']
    #allocation7 [shape = 'u8[65536]{0}', space=vmem, size = 0x10000, scoped, tag = 'input window, operand 3, single buffered']
    #allocation8 [shape = 'u8[65536]{0}', space=vmem, size = 0x10000, scoped, tag = 'input window, operand 5, single buffered']
    #allocation9 [shape = 's32[1]{0}', space=sflag, size = 0x4, scoped, tag = 'scoped memory for tpu_custom_call.1']
    #allocation10 [shape = 'u8[4096]{0}', space=vmem, size = 0x1000, scoped, tag = 'output window, operand 0, single buffered']
    %12 = vsyncpa [#allocation3], 0
    %13 = vsyncpa [#allocation6], 0
    %14 = vsyncpa [#allocation9], 0
    %15 = vsyncpa [#allocation4], 0
    // Predicated region
    $region2: #{tpu_custom_call.1} parent=1 // pred_check
      _
    $region3: #{tpu_custom_call.1} parent=1 // pred_check_branch
      %17 = sbr.rel (0) target = $region5
    $region4: #{tpu_custom_call.1} parent=1 // pred_region
      %s19 = ssub.s32 128, 128
      %20 = vsyncadd [#allocation3], %s19
      %s22 = sshll.u32 [#allocation2], 4
      %s23 = int_to_ptr.vmem [resolvable:$true] %s22
      %25 = dma.hbm_to_vmem [thread:$0]  %s0, 128, %s23, [#allocation3]
    $region5: #{tpu_custom_call.1} parent=1 // pred_fallthru
      _
    // Predicated region
    $region6: #{tpu_custom_call.1} parent=1 // pred_check
      _
    $region7: #{tpu_custom_call.1} parent=1 // pred_check_branch
      %27 = sbr.rel (0) target = $region9
    $region8: #{tpu_custom_call.1} parent=1 // pred_region
      %s29 = ssub.s32 2048, 2048
      %30 = vsyncadd [#allocation6], %s29
      %s31 = sshll.u32 [#allocation5], 4
      %s32 = int_to_ptr.vmem [resolvable:$true] %s31
      %37 = dma.hbm_to_vmem [thread:$0]  %s1, 2048, %s32, [#allocation6], 128, 128, 8
    $region9: #{tpu_custom_call.1} parent=1 // pred_fallthru
      _
    // Predicated region
    $region10: #{tpu_custom_call.1} parent=1 // pred_check
      _
    $region11: #{tpu_custom_call.1} parent=1 // pred_check_branch
      %39 = sbr.rel (0) target = $region13
    $region12: #{tpu_custom_call.1} parent=1 // pred_region
      _
    $region13: #{tpu_custom_call.1} parent=1 // pred_fallthru
      _
    // Predicated region
    $region14: #{tpu_custom_call.1} parent=1 // pred_check
      _
    $region15: #{tpu_custom_call.1} parent=1 // pred_check_branch
      %41 = sbr.rel (0) target = $region17
    $region16: #{tpu_custom_call.1} parent=1 // pred_region
      %s43 = ssub.s32 2048, 2048
      %44 = vsyncadd [#allocation6], %s43
      %s45 = sshll.u32 [#allocation7], 4
      %s46 = int_to_ptr.vmem [resolvable:$true] %s45
      %51 = dma.hbm_to_vmem [thread:$0]  %s3, 2048, %s46, [#allocation6], 128, 128, 8
    $region17: #{tpu_custom_call.1} parent=1 // pred_fallthru
      _
    // Predicated region
    $region18: #{tpu_custom_call.1} parent=1 // pred_check
      _
    $region19: #{tpu_custom_call.1} parent=1 // pred_check_branch
      %53 = sbr.rel (0) target = $region21
    $region20: #{tpu_custom_call.1} parent=1 // pred_region
      _
    $region21: #{tpu_custom_call.1} parent=1 // pred_fallthru
      _
    // Predicated region
    $region22: #{tpu_custom_call.1} parent=1 // pred_check
      _
    $region23: #{tpu_custom_call.1} parent=1 // pred_check_branch
      %55 = sbr.rel (0) target = $region25
    $region24: #{tpu_custom_call.1} parent=1 // pred_region
      %s57 = ssub.s32 2048, 2048
      %58 = vsyncadd [#allocation9], %s57
      %s59 = sshll.u32 [#allocation8], 4
      %s60 = int_to_ptr.vmem [resolvable:$true] %s59
      %65 = dma.hbm_to_vmem [thread:$0]  %s5, 2048, %s60, [#allocation9], 128, 128, 8
    $region25: #{tpu_custom_call.1} parent=1 // pred_fallthru
      _
    // Predicated region
    $region26: #{tpu_custom_call.1} parent=1 // pred_check
      _
    $region27: #{tpu_custom_call.1} parent=1 // pred_check_branch
      %67 = sbr.rel (0) target = $region29
    $region28: #{tpu_custom_call.1} parent=1 // pred_region
      _
    $region29: #{tpu_custom_call.1} parent=1 // pred_fallthru
      _
    // Predicated region
    $region30: #{tpu_custom_call.1} parent=1 // pred_check
      _
    $region31: #{tpu_custom_call.1} parent=1 // pred_check_branch
      %69 = sbr.rel (0) target = $region33
    $region32: #{tpu_custom_call.1} parent=1 // pred_region
      %70 = dma.done [#allocation3], 128
    $region33: #{tpu_custom_call.1} parent=1 // pred_fallthru
      _
    // Predicated region
    $region34: #{tpu_custom_call.1} parent=1 // pred_check
      _
    $region35: #{tpu_custom_call.1} parent=1 // pred_check_branch
      %72 = sbr.rel (0) target = $region37
    $region36: #{tpu_custom_call.1} parent=1 // pred_region
      %73 = dma.done [#allocation6], 2048
    $region37: #{tpu_custom_call.1} parent=1 // pred_fallthru
      _
    // Predicated region
    $region38: #{tpu_custom_call.1} parent=1 // pred_check
      _
    $region39: #{tpu_custom_call.1} parent=1 // pred_check_branch
      %75 = sbr.rel (0) target = $region41
    $region40: #{tpu_custom_call.1} parent=1 // pred_region
      %76 = dma.done [#allocation6], 2048
    $region41: #{tpu_custom_call.1} parent=1 // pred_fallthru
      _
    // Predicated region
    $region42: #{tpu_custom_call.1} parent=1 // pred_check
      _
    $region43: #{tpu_custom_call.1} parent=1 // pred_check_branch
      %78 = sbr.rel (0) target = $region45
    $region44: #{tpu_custom_call.1} parent=1 // pred_region
      %79 = dma.done [#allocation9], 2048
    $region45: #{tpu_custom_call.1} parent=1 // pred_fallthru
      _
    %v80 = vld [vmem:[#allocation2] sm:$0xff]
    %v81 = vld [vmem:[#allocation5] sm:$0xff]
    %v82 = vld [vmem:[#allocation5 + $0x8] sm:$0xff]
    %v83 = vld [vmem:[#allocation5 + $0x10] sm:$0xff]
    %v84 = vld [vmem:[#allocation5 + $0x18] sm:$0xff]
    %v85 = vld [vmem:[#allocation5 + $0x20] sm:$0xff]
    %v86 = vld [vmem:[#allocation5 + $0x28] sm:$0xff]
    %v87 = vld [vmem:[#allocation5 + $0x30] sm:$0xff]
    %v88 = vld [vmem:[#allocation5 + $0x38] sm:$0xff]
    %v89 = vld [vmem:[#allocation5 + $0x40] sm:$0xff]
    %v90 = vld [vmem:[#allocation5 + $0x48] sm:$0xff]
    %v91 = vld [vmem:[#allocation5 + $0x50] sm:$0xff]
    %v92 = vld [vmem:[#allocation5 + $0x58] sm:$0xff]
    %v93 = vld [vmem:[#allocation5 + $0x60] sm:$0xff]
    %v94 = vld [vmem:[#allocation5 + $0x68] sm:$0xff]
    %v95 = vld [vmem:[#allocation5 + $0x70] sm:$0xff]
    %v96 = vld [vmem:[#allocation5 + $0x78] sm:$0xff]
    %v97 = vld [vmem:[%s2] sm:$0x1]
    %v99 = vlaneseq
    %v100 = vshrl.u32 %v99, 7
    %v101 = vsub.s32 0, %v100
    %v102 = vrot.slane %v97, %v101
    %104 = vmatprep.subr.mxu0 0.0
    %105 = vmatpush1.msra.mxu0 %v96
    %106 = vmatprep.subr.mxu0 0.0
    %107 = vmatpush1.msra.mxu0 %v95
    %108 = vmatprep.subr.mxu0 0.0
    %109 = vmatpush1.msra.mxu0 %v94
    %110 = vmatprep.subr.mxu0 0.0
    %111 = vmatpush1.msra.mxu0 %v93
    %112 = vmatprep.subr.mxu0 0.0
    %113 = vmatpush1.msra.mxu0 %v92
    %114 = vmatprep.subr.mxu0 0.0
    %115 = vmatpush1.msra.mxu0 %v91
    %116 = vmatprep.subr.mxu0 0.0
    %117 = vmatpush1.msra.mxu0 %v90
    %118 = vmatprep.subr.mxu0 0.0
    %119 = vmatpush1.msra.mxu0 %v89
    %120 = vmatprep.subr.mxu0 0.0
    %121 = vmatpush1.msra.mxu0 %v88
    %122 = vmatprep.subr.mxu0 0.0
    %123 = vmatpush1.msra.mxu0 %v87
    %124 = vmatprep.subr.mxu0 0.0
    %125 = vmatpush1.msra.mxu0 %v86
    %126 = vmatprep.subr.mxu0 0.0
    %127 = vmatpush1.msra.mxu0 %v85
    %128 = vmatprep.subr.mxu0 0.0
    %129 = vmatpush1.msra.mxu0 %v84
    %130 = vmatprep.subr.mxu0 0.0
    %131 = vmatpush1.msra.mxu0 %v83
    %132 = vmatprep.subr.mxu0 0.0
    %133 = vmatpush1.msra.mxu0 %v82
    %134 = vmatprep.subr.mxu0 0.0
    %135 = vmatpush1.msra.mxu0 %v81
    %136 = vmatprep.subr.mxu0 0.0
    %137 = vmatpush2.msra.mxu0 0.0
    %138 = vmatprep.subr.mxu0 0.0
    %139 = vmatpush2.msra.mxu0 0.0
    %140 = vmatprep.subr.mxu0 0.0
    %141 = vmatpush2.msra.mxu0 0.0
    %142 = vmatprep.subr.mxu0 0.0
    %143 = vmatpush2.msra.mxu0 0.0
    %144 = vmatprep.subr.mxu0 0.0
    %145 = vmatpush2.msra.mxu0 0.0
    %146 = vmatprep.subr.mxu0 0.0
    %147 = vmatpush2.msra.mxu0 0.0
    %148 = vmatprep.subr.mxu0 0.0
    %149 = vmatpush2.msra.mxu0 0.0
    %150 = vmatprep.subr.mxu0 0.0
    %151 = vmatpush2.msra.mxu0 0.0
    %152 = vmatprep.subr.mxu0 0.0
    %153 = vmatpush2.msra.mxu0 0.0
    %154 = vmatprep.subr.mxu0 0.0
    %155 = vmatpush2.msra.mxu0 0.0
    %156 = vmatprep.subr.mxu0 0.0
    %157 = vmatpush2.msra.mxu0 0.0
    %158 = vmatprep.subr.mxu0 0.0
    %159 = vmatpush2.msra.mxu0 0.0
    %160 = vmatprep.subr.mxu0 0.0
    %161 = vmatpush2.msra.mxu0 0.0
    %162 = vmatprep.subr.mxu0 0.0
    %163 = vmatpush2.msra.mxu0 0.0
    %164 = vmatprep.subr.mxu0 0.0
    %165 = vmatpush2.msra.mxu0 0.0
    %166 = vmatprep.subr.mxu0 0.0
    %167 = vmatpush2.msra.mxu0 0.0
    %168 = vmatprep.mubr.f32.mxu0 0.0
    %169 = vmatmul.mubr.f32.gmra.mxu0 %v80
    %v170 = vpop.f32.mrf.mxu0
    %v171 = vadd.f32 %v102, %v170
    %v172 = vpop.f32.mrf.mxu0
    %173 = vdwg.mxu0
    %v174 = vld [vmem:[#allocation7] sm:$0xff]
    %v175 = vld [vmem:[#allocation7 + $0x8] sm:$0xff]
    %v176 = vld [vmem:[#allocation7 + $0x10] sm:$0xff]
    %v177 = vld [vmem:[#allocation7 + $0x18] sm:$0xff]
    %v178 = vld [vmem:[#allocation7 + $0x20] sm:$0xff]
    %v179 = vld [vmem:[#allocation7 + $0x28] sm:$0xff]
    %v180 = vld [vmem:[#allocation7 + $0x30] sm:$0xff]
    %v181 = vld [vmem:[#allocation7 + $0x38] sm:$0xff]
    %v182 = vld [vmem:[#allocation7 + $0x40] sm:$0xff]
    %v183 = vld [vmem:[#allocation7 + $0x48] sm:$0xff]
    %v184 = vld [vmem:[#allocation7 + $0x50] sm:$0xff]
    %v185 = vld [vmem:[#allocation7 + $0x58] sm:$0xff]
    %v186 = vld [vmem:[#allocation7 + $0x60] sm:$0xff]
    %v187 = vld [vmem:[#allocation7 + $0x68] sm:$0xff]
    %v188 = vld [vmem:[#allocation7 + $0x70] sm:$0xff]
    %v189 = vld [vmem:[#allocation7 + $0x78] sm:$0xff]
    %v190 = vld [vmem:[%s4] sm:$0x1]
    %vm191 = vcmp.ge.f32.partialorder %v171, 0.0
    %v192 = vmul.f32 %v171, 0.01
    %v193 = vsel %vm191, %v171, %v192
    %v195 = vlaneseq
    %v196 = vshrl.u32 %v195, 7
    %v197 = vsub.s32 0, %v196
    %v198 = vrot.slane %v190, %v197
    %200 = vmatprep.subr.mxu0 0.0
    %201 = vmatpush1.msra.mxu0 %v189
    %202 = vmatprep.subr.mxu0 0.0
    %203 = vmatpush1.msra.mxu0 %v188
    %204 = vmatprep.subr.mxu0 0.0
    %205 = vmatpush1.msra.mxu0 %v187
    %206 = vmatprep.subr.mxu0 0.0
    %207 = vmatpush1.msra.mxu0 %v186
    %208 = vmatprep.subr.mxu0 0.0
    %209 = vmatpush1.msra.mxu0 %v185
    %210 = vmatprep.subr.mxu0 0.0
    %211 = vmatpush1.msra.mxu0 %v184
    %212 = vmatprep.subr.mxu0 0.0
    %213 = vmatpush1.msra.mxu0 %v183
    %214 = vmatprep.subr.mxu0 0.0
    %215 = vmatpush1.msra.mxu0 %v182
    %216 = vmatprep.subr.mxu0 0.0
    %217 = vmatpush1.msra.mxu0 %v181
    %218 = vmatprep.subr.mxu0 0.0
    %219 = vmatpush1.msra.mxu0 %v180
    %220 = vmatprep.subr.mxu0 0.0
    %221 = vmatpush1.msra.mxu0 %v179
    %222 = vmatprep.subr.mxu0 0.0
    %223 = vmatpush1.msra.mxu0 %v178
    %224 = vmatprep.subr.mxu0 0.0
    %225 = vmatpush1.msra.mxu0 %v177
    %226 = vmatprep.subr.mxu0 0.0
    %227 = vmatpush1.msra.mxu0 %v176
    %228 = vmatprep.subr.mxu0 0.0
    %229 = vmatpush1.msra.mxu0 %v175
    %230 = vmatprep.subr.mxu0 0.0
    %231 = vmatpush1.msra.mxu0 %v174
    %232 = vmatprep.subr.mxu0 0.0
    %233 = vmatpush2.msra.mxu0 0.0
    %234 = vmatprep.subr.mxu0 0.0
    %235 = vmatpush2.msra.mxu0 0.0
    %236 = vmatprep.subr.mxu0 0.0
    %237 = vmatpush2.msra.mxu0 0.0
    %238 = vmatprep.subr.mxu0 0.0
    %239 = vmatpush2.msra.mxu0 0.0
    %240 = vmatprep.subr.mxu0 0.0
    %241 = vmatpush2.msra.mxu0 0.0
    %242 = vmatprep.subr.mxu0 0.0
    %243 = vmatpush2.msra.mxu0 0.0
    %244 = vmatprep.subr.mxu0 0.0
    %245 = vmatpush2.msra.mxu0 0.0
    %246 = vmatprep.subr.mxu0 0.0
    %247 = vmatpush2.msra.mxu0 0.0
    %248 = vmatprep.subr.mxu0 0.0
    %249 = vmatpush2.msra.mxu0 0.0
    %250 = vmatprep.subr.mxu0 0.0
    %251 = vmatpush2.msra.mxu0 0.0
    %252 = vmatprep.subr.mxu0 0.0
    %253 = vmatpush2.msra.mxu0 0.0
    %254 = vmatprep.subr.mxu0 0.0
    %255 = vmatpush2.msra.mxu0 0.0
    %256 = vmatprep.subr.mxu0 0.0
    %257 = vmatpush2.msra.mxu0 0.0
    %258 = vmatprep.subr.mxu0 0.0
    %259 = vmatpush2.msra.mxu0 0.0
    %260 = vmatprep.subr.mxu0 0.0
    %261 = vmatpush2.msra.mxu0 0.0
    %262 = vmatprep.subr.mxu0 0.0
    %263 = vmatpush2.msra.mxu0 0.0
    %264 = vmatprep.mubr.f32.mxu0 0.0
    %265 = vmatmul.mubr.f32.gmra.mxu0 %v193
    %v266 = vpop.f32.mrf.mxu0
    %v267 = vadd.f32 %v198, %v266
    %v268 = vpop.f32.mrf.mxu0
    %269 = vdwg.mxu0
    %v270 = vld [vmem:[#allocation8] sm:$0xff]
    %v271 = vld [vmem:[#allocation8 + $0x8] sm:$0xff]
    %v272 = vld [vmem:[#allocation8 + $0x10] sm:$0xff]
    %v273 = vld [vmem:[#allocation8 + $0x18] sm:$0xff]
    %v274 = vld [vmem:[#allocation8 + $0x20] sm:$0xff]
    %v275 = vld [vmem:[#allocation8 + $0x28] sm:$0xff]
    %v276 = vld [vmem:[#allocation8 + $0x30] sm:$0xff]
    %v277 = vld [vmem:[#allocation8 + $0x38] sm:$0xff]
    %v278 = vld [vmem:[#allocation8 + $0x40] sm:$0xff]
    %v279 = vld [vmem:[#allocation8 + $0x48] sm:$0xff]
    %v280 = vld [vmem:[#allocation8 + $0x50] sm:$0xff]
    %v281 = vld [vmem:[#allocation8 + $0x58] sm:$0xff]
    %v282 = vld [vmem:[#allocation8 + $0x60] sm:$0xff]
    %v283 = vld [vmem:[#allocation8 + $0x68] sm:$0xff]
    %v284 = vld [vmem:[#allocation8 + $0x70] sm:$0xff]
    %v285 = vld [vmem:[#allocation8 + $0x78] sm:$0xff]
    %v286 = vld [vmem:[%s6] sm:$0x1]
    %vm287 = vcmp.ge.f32.partialorder %v267, 0.0
    %v288 = vmul.f32 %v267, 0.01
    %v289 = vsel %vm287, %v267, %v288
    %v291 = vlaneseq
    %v292 = vshrl.u32 %v291, 7
    %v293 = vsub.s32 0, %v292
    %v294 = vrot.slane %v286, %v293
    %296 = vmatprep.subr.mxu0 0.0
    %297 = vmatpush1.msra.mxu0 %v285
    %298 = vmatprep.subr.mxu0 0.0
    %299 = vmatpush1.msra.mxu0 %v284
    %300 = vmatprep.subr.mxu0 0.0
    %301 = vmatpush1.msra.mxu0 %v283
    %302 = vmatprep.subr.mxu0 0.0
    %303 = vmatpush1.msra.mxu0 %v282
    %304 = vmatprep.subr.mxu0 0.0
    %305 = vmatpush1.msra.mxu0 %v281
    %306 = vmatprep.subr.mxu0 0.0
    %307 = vmatpush1.msra.mxu0 %v280
    %308 = vmatprep.subr.mxu0 0.0
    %309 = vmatpush1.msra.mxu0 %v279
    %310 = vmatprep.subr.mxu0 0.0
    %311 = vmatpush1.msra.mxu0 %v278
    %312 = vmatprep.subr.mxu0 0.0
    %313 = vmatpush1.msra.mxu0 %v277
    %314 = vmatprep.subr.mxu0 0.0
    %315 = vmatpush1.msra.mxu0 %v276
    %316 = vmatprep.subr.mxu0 0.0
    %317 = vmatpush1.msra.mxu0 %v275
    %318 = vmatprep.subr.mxu0 0.0
    %319 = vmatpush1.msra.mxu0 %v274
    %320 = vmatprep.subr.mxu0 0.0
    %321 = vmatpush1.msra.mxu0 %v273
    %322 = vmatprep.subr.mxu0 0.0
    %323 = vmatpush1.msra.mxu0 %v272
    %324 = vmatprep.subr.mxu0 0.0
    %325 = vmatpush1.msra.mxu0 %v271
    %326 = vmatprep.subr.mxu0 0.0
    %327 = vmatpush1.msra.mxu0 %v270
    %328 = vmatprep.subr.mxu0 0.0
    %329 = vmatpush2.msra.mxu0 0.0
    %330 = vmatprep.subr.mxu0 0.0
    %331 = vmatpush2.msra.mxu0 0.0
    %332 = vmatprep.subr.mxu0 0.0
    %333 = vmatpush2.msra.mxu0 0.0
    %334 = vmatprep.subr.mxu0 0.0
    %335 = vmatpush2.msra.mxu0 0.0
    %336 = vmatprep.subr.mxu0 0.0
    %337 = vmatpush2.msra.mxu0 0.0
    %338 = vmatprep.subr.mxu0 0.0
    %339 = vmatpush2.msra.mxu0 0.0
    %340 = vmatprep.subr.mxu0 0.0
    %341 = vmatpush2.msra.mxu0 0.0
    %342 = vmatprep.subr.mxu0 0.0
    %343 = vmatpush2.msra.mxu0 0.0
    %344 = vmatprep.subr.mxu0 0.0
    %345 = vmatpush2.msra.mxu0 0.0
    %346 = vmatprep.subr.mxu0 0.0
    %347 = vmatpush2.msra.mxu0 0.0
    %348 = vmatprep.subr.mxu0 0.0
    %349 = vmatpush2.msra.mxu0 0.0
    %350 = vmatprep.subr.mxu0 0.0
    %351 = vmatpush2.msra.mxu0 0.0
    %352 = vmatprep.subr.mxu0 0.0
    %353 = vmatpush2.msra.mxu0 0.0
    %354 = vmatprep.subr.mxu0 0.0
    %355 = vmatpush2.msra.mxu0 0.0
    %356 = vmatprep.subr.mxu0 0.0
    %357 = vmatpush2.msra.mxu0 0.0
    %358 = vmatprep.subr.mxu0 0.0
    %359 = vmatpush2.msra.mxu0 0.0
    %360 = vmatprep.mubr.f32.mxu0 0.0
    %361 = vmatmul.mubr.f32.gmra.mxu0 %v289
    %v362 = vpop.f32.mrf.mxu0
    %v363 = vadd.f32 %v294, %v362
    %v364 = vpop.f32.mrf.mxu0
    %365 = vdwg.mxu0
    %366 = vst [vmem:[#allocation10] sm:$0xff] %v363
    // Predicated region
    $region46: #{tpu_custom_call.1} parent=1 // pred_check
      _
    $region47: #{tpu_custom_call.1} parent=1 // pred_check_branch
      %368 = sbr.rel (0) target = $region49
    $region48: #{tpu_custom_call.1} parent=1 // pred_region
      %s370 = ssub.s32 128, 128
      %371 = vsyncadd [#allocation4], %s370
      %s373 = sshll.u32 [#allocation10], 4
      %s374 = int_to_ptr.vmem [resolvable:$true] %s373
      %376 = dma.vmem_to_hbm [thread:$0]  %s374, 128, %s7, [#allocation4]
    $region49: #{tpu_custom_call.1} parent=1 // pred_fallthru
      _
    // Predicated region
    $region50: #{tpu_custom_call.1} parent=1 // pred_check
      _
    $region51: #{tpu_custom_call.1} parent=1 // pred_check_branch
      %378 = sbr.rel (0) target = $region53
    $region52: #{tpu_custom_call.1} parent=1 // pred_region
      %379 = dma.done [#allocation4], 128
    $region53: #{tpu_custom_call.1} parent=1 // pred_fallthru
      _
    %380 = vsyncpa [#allocation3], 1
    %381 = vsyncpa [#allocation6], 1
    %382 = vsyncpa [#allocation9], 1
    %383 = vsyncpa [#allocation4], 1

</llo_original>
